<compile_context>
chip_gen: v7x
topology: tpu7x:2x2x1
jax: 0.10.0
libtpu: 0.0.40
codegen_flags: <defaults>
</compile_context>

<pallas_src>
import numpy as np
import jax
import jax.numpy as jnp
from jax.experimental import pallas as pl
from jax.experimental.pallas import tpu as pltpu

EMBED_DIM = 768   # wrapper1D always builds Embeddings1D with embed_dim=768
LN_EPS = 1e-5     # torch.nn.LayerNorm default eps
PADDING_IDX = 1


def get_stack_num(input_len, target_seq_len):
    # mirrors Embeddings1D.get_stack_num for embed_dim == 768
    for i in range(1, input_len + 1):
        if input_len % i == 0 and input_len // i <= target_seq_len:
            return i
    return input_len


def embed_kernel(x_ref, w_ref, b_ref, g_ref, posb_ref, o_ref):
    # x_ref:    (tb, tm, K)   patches for tb batch rows x tm sequence rows
    # w_ref:    (K, 768)      conv weight as matmul (resident across the whole grid)
    # b_ref:    (1, 768)      conv bias (resident)
    # g_ref:    (1, 768)      LayerNorm gamma (resident)
    # posb_ref: (tm, 768)     position embeddings + LayerNorm beta (resident across inner B axis)
    # o_ref:    (tb, tm, 768)
    tb, tm, k = x_ref.shape
    # leading-dim collapse is layout-free (tm % 8 == 0, lane dim unchanged)
    x2 = x_ref[...].reshape(tb * tm, k)
    # NOTE: default matmul precision is fine for small K (= C*stack); if K grows large and
    # bit-level parity with torch's f32 Conv1d matters, pass precision=HIGHEST here.
    y = jnp.dot(x2, w_ref[...], preferred_element_type=jnp.float32)
    y = y + b_ref[...]                                     # conv bias
    # one-pass LayerNorm statistics (biased var, like torch): var = E[y^2] - mu^2
    inv_d = 1.0 / EMBED_DIM
    mu = jnp.sum(y, axis=-1, keepdims=True) * inv_d
    var = jnp.sum(y * y, axis=-1, keepdims=True) * inv_d - mu * mu
    yn = (y - mu) * jax.lax.rsqrt(var + LN_EPS)
    yn = yn * g_ref[...]
    out = yn.reshape(tb, tm, EMBED_DIM) + posb_ref[...][None, :, :]
    o_ref[...] = out.astype(o_ref.dtype)


def _round_up(n, m):
    return (n + m - 1) // m * m


def _choose_tiles(b, seq, k, row_cap=1024, vmem_budget=24 << 20):
    """Pick (tb, tm): rows-per-step as large as possible (amortize ~0.35us/step) while the
    double-buffered f32 block footprint stays inside `vmem_budget` (<< 48 MiB limit)."""
    # per-row f32 bytes, double-buffered: patches (K lanes, padded to >=128) + out (768) + pos (768)
    per_row = 2 * 4 * (max(k, 128) + 2 * EMBED_DIM)
    cap = max(8, min(row_cap, (vmem_budget // per_row) // 8 * 8))
    tm = min(_round_up(seq, 8), cap)          # never a tiny tile, never an oversized tm==seq
    tb = max(1, min(b, cap // tm))
    # v7x megacore: keep >= 2 grid steps when the problem size allows it
    if _round_up(seq, tm) // tm == 1 and tb == b and b >= 2:
        tb = (b + 1) // 2
    return tb, tm


def wrapper1d_forward(x, params, stack_num, tb=None, tm=None, out_dtype=None):
    """wrapper1D.forward with output_raw=True  ==  Embeddings1D.forward(x)."""
    b, c, l = x.shape
    s = stack_num
    seq = l // s
    K = c * s
    if out_dtype is None:
        out_dtype = x.dtype

    # create_position_ids_from_inputs_embeds with padding_idx=1 -> ids = [2, .., S+1]
    # PyTorch would raise on OOB embedding lookup; JAX clamps silently, so guard here.
    assert seq + PADDING_IDX + 1 <= params["pos_emb"].shape[0], (
        "sequence length exceeds position-embedding table")

    # glue: build patches (B, S, C*s); flat index ci*s + ki matches Conv1d weight layout.
    # TODO(synk): for K approaching 768 this extra HBM pass should be fused into the kernel
    # (block over (1, C, tm*s) and accumulate per-channel); negligible for small K.
    patches = x.reshape(b, c, seq, s).transpose(0, 2, 1, 3).reshape(b, seq, K)
    w = params["conv_w"].reshape(EMBED_DIM, K).T                    # (K, 768)
    bias = params["conv_b"].reshape(1, EMBED_DIM)
    gamma = params["ln_w"].reshape(1, EMBED_DIM)

    pos_ids = jnp.arange(PADDING_IDX + 1, seq + PADDING_IDX + 1, dtype=jnp.int32)
    # fold LayerNorm beta into the pos table (saves one (1,768) DMA + one add per tile)
    pos_plus_beta = (params["pos_emb"][pos_ids] + params["ln_b"][None, :]).astype(out_dtype)

    tb_auto, tm_auto = _choose_tiles(b, seq, K)
    tb = tb_auto if tb is None else tb
    tm = tm_auto if tm is None else tm
    assert tm % 8 == 0 and tb >= 1

    # pad seq / batch up to the tile sizes (padded rows are computed and sliced off below)
    seq_p = _round_up(seq, tm)
    b_p = _round_up(b, tb)
    if seq_p != seq or b_p != b:
        patches = jnp.pad(patches, ((0, b_p - b), (0, seq_p - seq), (0, 0)))
    if seq_p != seq:
        pos_plus_beta = jnp.pad(pos_plus_beta, ((0, seq_p - seq), (0, 0)))

    grid = (seq_p // tm, b_p // tb)   # seq outermost, batch innermost -> pos resident across B

    out = pl.pallas_call(
        embed_kernel,
        out_shape=jax.ShapeDtypeStruct((b_p, seq_p, EMBED_DIM), out_dtype),
        grid_spec=pltpu.PrefetchScalarGridSpec(
            num_scalar_prefetch=0,
            grid=grid,
            in_specs=[
                pl.BlockSpec((tb, tm, K), lambda i, bb: (bb, i, 0)),          # patches
                pl.BlockSpec((K, EMBED_DIM), lambda i, bb: (0, 0)),           # conv weight
                pl.BlockSpec((1, EMBED_DIM), lambda i, bb: (0, 0)),           # conv bias
                pl.BlockSpec((1, EMBED_DIM), lambda i, bb: (0, 0)),           # LN gamma
                pl.BlockSpec((tm, EMBED_DIM), lambda i, bb: (i, 0)),          # pos + beta
            ],
            out_specs=pl.BlockSpec((tb, tm, EMBED_DIM), lambda i, bb: (bb, i, 0)),
        ),
        compiler_params=pltpu.CompilerParams(
            dimension_semantics=("parallel", "parallel"),
            vmem_limit_bytes=48 << 20,   # <= v7x 64 MiB physical; overrides v5e's 16 MiB scoped default
        ),
    )(patches, w, bias, gamma, pos_plus_beta)

    if seq_p != seq or b_p != b:
        out = out[:b, :seq]
    return out


def reference_forward(x, params, stack_num):
    """Pure-JAX reference of the same math (for correctness check)."""
    b, c, l = x.shape
    s = stack_num
    seq = l // s
    patches = x.reshape(b, c, seq, s).transpose(0, 2, 1, 3).reshape(b, seq, c * s)
    w = params["conv_w"].reshape(EMBED_DIM, c * s).T
    y = patches @ w + params["conv_b"][None, None, :]
    mu = jnp.mean(y, axis=-1, keepdims=True)
    var = jnp.mean((y - mu) ** 2, axis=-1, keepdims=True)
    yn = (y - mu) / jnp.sqrt(var + LN_EPS) * params["ln_w"] + params["ln_b"]
    pos_ids = jnp.arange(PADDING_IDX + 1, seq + PADDING_IDX + 1, dtype=jnp.int32)
    return yn + params["pos_emb"][pos_ids][None]


def init_params(key, in_channels, stack_num, target_seq_len):
    k1, k2, k3 = jax.random.split(key, 3)
    conv_w = 0.02 * jax.random.normal(k1, (EMBED_DIM, in_channels, stack_num), jnp.float32)
    conv_b = 0.02 * jax.random.normal(k2, (EMBED_DIM,), jnp.float32)
    ln_w = jnp.ones((EMBED_DIM,), jnp.float32)
    ln_b = jnp.zeros((EMBED_DIM,), jnp.float32)
    pos_emb = 0.02 * jax.random.normal(k3, (target_seq_len, EMBED_DIM), jnp.float32)
    pos_emb = pos_emb.at[PADDING_IDX].set(0.0)   # Embedding padding_idx row is zero
    # TODO(synk): conv_init / embedder_init copy pretrained RoBERTa weights; here we
    # use deterministic synthetic initialization instead (no checkpoint loading).
    return {"conv_w": conv_w, "conv_b": conv_b, "ln_w": ln_w, "ln_b": ln_b, "pos_emb": pos_emb}


if __name__ == "__main__":
    key = jax.random.PRNGKey(0)
    B, C, L = 2, 4, 96          # input_shape = (B, C, L)
    TARGET_SEQ_LEN = 64

    stack = get_stack_num(L, TARGET_SEQ_LEN)   # -> 2, so S = 48
    seq = L // stack

    kx, kp = jax.random.split(key)
    x = jax.random.normal(kx, (B, C, L), jnp.float32)
    params = init_params(kp, C, stack, TARGET_SEQ_LEN)

    ref = jax.block_until_ready(reference_forward(x, params, stack))

    # 1) default (auto) tile selection path: tm=48, tb=1 -> grid (1, 2)
    out = jax.block_until_ready(wrapper1d_forward(x, params, stack))
    assert out.shape == (B, seq, EMBED_DIM)
    np.testing.assert_allclose(np.asarray(out), np.asarray(ref), rtol=1e-4, atol=1e-4)

    # 2) multi-tile batched path: tb=2, tm=16 -> grid (3, 1)
    out2 = jax.block_until_ready(wrapper1d_forward(x, params, stack, tb=2, tm=16))
    np.testing.assert_allclose(np.asarray(out2), np.asarray(ref), rtol=1e-4, atol=1e-4)

    # 3) padded-tail path: tm=32 pads S 48 -> 64, tb=1 -> grid (2, 2); pad sliced off after
    out3 = jax.block_until_ready(wrapper1d_forward(x, params, stack, tb=1, tm=32))
    np.testing.assert_allclose(np.asarray(out3), np.asarray(ref), rtol=1e-4, atol=1e-4)

    print("KERNEL_OK")
</pallas_src>

<mosaic_0001>
module attributes {stable_mosaic.version = 11 : i64} {
  func.func @embed_kernel(%arg0: i32, %arg1: i32, %arg2: memref<1x48x8xf32, #tpu.memory_space<vmem>>, %arg3: memref<8x768xf32, #tpu.memory_space<vmem>>, %arg4: memref<1x768xf32, #tpu.memory_space<vmem>>, %arg5: memref<1x768xf32, #tpu.memory_space<vmem>>, %arg6: memref<48x768xf32, #tpu.memory_space<vmem>>, %arg7: memref<1x48x768xf32, #tpu.memory_space<vmem>>) attributes {dimension_semantics = [#tpu.dimension_semantics<parallel>, #tpu.dimension_semantics<parallel>], iteration_bounds = array<i64: 1, 2>, scalar_prefetch = 0 : i64, scratch_operands = 0 : i64, tpu.core_type = #tpu.core_type<tc>, window_params = [{transform_indices = @transform_0, window_bounds = array<i64: 1, 48, 8>}, {pipeline_mode = #tpu.pipeline_mode<synchronous>, transform_indices = @transform_1, window_bounds = array<i64: 8, 768>}, {pipeline_mode = #tpu.pipeline_mode<synchronous>, transform_indices = @transform_2, window_bounds = array<i64: 1, 768>}, {pipeline_mode = #tpu.pipeline_mode<synchronous>, transform_indices = @transform_3, window_bounds = array<i64: 1, 768>}, {transform_indices = @transform_4, window_bounds = array<i64: 48, 768>}, {transform_indices = @transform_5, window_bounds = array<i64: 1, 48, 768>}]} {
    %c0 = arith.constant 0 : index
    %c0_0 = arith.constant 0 : index
    %c0_1 = arith.constant 0 : index
    %0 = vector.load %arg2[%c0, %c0_0, %c0_1] : memref<1x48x8xf32, #tpu.memory_space<vmem>>, vector<1x48x8xf32>
    %1 = vector.shape_cast %0 : vector<1x48x8xf32> to vector<48x8xf32>
    %c0_2 = arith.constant 0 : index
    %c0_3 = arith.constant 0 : index
    %2 = vector.load %arg3[%c0_2, %c0_3] : memref<8x768xf32, #tpu.memory_space<vmem>>, vector<8x768xf32>
    %cst = arith.constant dense<0.000000e+00> : vector<48x768xf32>
    %3 = tpu.matmul %1, %2, %cst {dimension_numbers = #tpu.dot_dimension_numbers<[1], [0], [0], [1], [0, 0, 1, 1], [], []>} : vector<48x8xf32>, vector<8x768xf32>, vector<48x768xf32> -> vector<48x768xf32>
    %c0_4 = arith.constant 0 : index
    %c0_5 = arith.constant 0 : index
    %4 = vector.load %arg4[%c0_4, %c0_5] : memref<1x768xf32, #tpu.memory_space<vmem>>, vector<1x768xf32>
    %5 = vector.broadcast %4 : vector<1x768xf32> to vector<48x768xf32>
    %6 = arith.addf %3, %5 : vector<48x768xf32>
    %cst_6 = arith.constant dense<0.000000e+00> : vector<48xf32>
    %7 = vector.multi_reduction <add>, %6, %cst_6 [1] : vector<48x768xf32> to vector<48xf32>
    %8 = vector.shape_cast %7 : vector<48xf32> to vector<48x1xf32>
    %cst_7 = arith.constant 0.00130208337 : f32
    %9 = vector.broadcast %cst_7 : f32 to vector<48x1xf32>
    %10 = arith.mulf %8, %9 : vector<48x1xf32>
    %11 = arith.mulf %6, %6 : vector<48x768xf32>
    %cst_8 = arith.constant dense<0.000000e+00> : vector<48xf32>
    %12 = vector.multi_reduction <add>, %11, %cst_8 [1] : vector<48x768xf32> to vector<48xf32>
    %13 = vector.shape_cast %12 : vector<48xf32> to vector<48x1xf32>
    %cst_9 = arith.constant 0.00130208337 : f32
    %14 = vector.broadcast %cst_9 : f32 to vector<48x1xf32>
    %15 = arith.mulf %13, %14 : vector<48x1xf32>
    %16 = arith.mulf %10, %10 : vector<48x1xf32>
    %17 = arith.subf %15, %16 : vector<48x1xf32>
    %18 = vector.broadcast %10 : vector<48x1xf32> to vector<48x768xf32>
    %19 = arith.subf %6, %18 : vector<48x768xf32>
    %cst_10 = arith.constant 9.99999974E-6 : f32
    %20 = vector.broadcast %cst_10 : f32 to vector<48x1xf32>
    %21 = arith.addf %17, %20 : vector<48x1xf32>
    %22 = math.rsqrt %21 : vector<48x1xf32>
    %23 = vector.broadcast %22 : vector<48x1xf32> to vector<48x768xf32>
    %24 = arith.mulf %19, %23 : vector<48x768xf32>
    %c0_11 = arith.constant 0 : index
    %c0_12 = arith.constant 0 : index
    %25 = vector.load %arg5[%c0_11, %c0_12] : memref<1x768xf32, #tpu.memory_space<vmem>>, vector<1x768xf32>
    %26 = vector.broadcast %25 : vector<1x768xf32> to vector<48x768xf32>
    %27 = arith.mulf %24, %26 : vector<48x768xf32>
    %28 = vector.shape_cast %27 : vector<48x768xf32> to vector<1x48x768xf32>
    %c0_13 = arith.constant 0 : index
    %c0_14 = arith.constant 0 : index
    %29 = vector.load %arg6[%c0_13, %c0_14] : memref<48x768xf32, #tpu.memory_space<vmem>>, vector<48x768xf32>
    %30 = vector.shape_cast %29 : vector<48x768xf32> to vector<1x48x768xf32>
    %31 = arith.addf %28, %30 : vector<1x48x768xf32>
    %c0_15 = arith.constant 0 : index
    %c0_16 = arith.constant 0 : index
    %c0_17 = arith.constant 0 : index
    %32 = vector.load %arg7[%c0_15, %c0_16, %c0_17] : memref<1x48x768xf32, #tpu.memory_space<vmem>>, vector<1x48x768xf32>
    tpu.vector_store %arg7[%c0_15, %c0_16, %c0_17], %31 {strides = array<i32>} : memref<1x48x768xf32, #tpu.memory_space<vmem>>, vector<1x48x768xf32>,
    return
  }
  func.func @transform_0(%arg0: i32, %arg1: i32) -> (i32, i32, i32) {
    %c0_i32 = arith.constant 0 : i32
    %c0_i32_0 = arith.constant 0 : i32
    return %arg1, %arg0, %c0_i32 : i32, i32, i32
  }
  func.func @transform_1(%arg0: i32, %arg1: i32) -> (i32, i32) {
    %c0_i32 = arith.constant 0 : i32
    %c0_i32_0 = arith.constant 0 : i32
    %c0_i32_1 = arith.constant 0 : i32
    return %c0_i32, %c0_i32_0 : i32, i32
  }
  func.func @transform_2(%arg0: i32, %arg1: i32) -> (i32, i32) {
    %c0_i32 = arith.constant 0 : i32
    %c0_i32_0 = arith.constant 0 : i32
    %c0_i32_1 = arith.constant 0 : i32
    return %c0_i32, %c0_i32_0 : i32, i32
  }
  func.func @transform_3(%arg0: i32, %arg1: i32) -> (i32, i32) {
    %c0_i32 = arith.constant 0 : i32
    %c0_i32_0 = arith.constant 0 : i32
    %c0_i32_1 = arith.constant 0 : i32
    return %c0_i32, %c0_i32_0 : i32, i32
  }
  func.func @transform_4(%arg0: i32, %arg1: i32) -> (i32, i32) {
    %c0_i32 = arith.constant 0 : i32
    %c0_i32_0 = arith.constant 0 : i32
    return %arg0, %c0_i32 : i32, i32
  }
  func.func @transform_5(%arg0: i32, %arg1: i32) -> (i32, i32, i32) {
    %c0_i32 = arith.constant 0 : i32
    %c0_i32_0 = arith.constant 0 : i32
    return %arg1, %arg0, %c0_i32 : i32, i32, i32
  }
}

</mosaic_0001>

<llo_original>
// kernel: tpu_custom_call.1
$region0: #{tpu_custom_call.1}
  #allocation0 [shape = 'u32[]', space=smem, size = 0x4, offset = 0x4, fixed_abs, tag = 'smem constant byte address 0x4 - core index']
  #allocation1 [shape = 'u32[144,128]{1,0:T(1,128)}', space=vmem, size = 0x12000, scoped, tag = 'internal scratch']
  %s0 = inlined_call_operand.vmem [shape: f32[2,48,8], index: 0, kind: input, shape index: {}]
  %s1 = inlined_call_operand.vmem [shape: f32[8,768], index: 1, kind: input, shape index: {}]
  %s2 = inlined_call_operand.vmem [shape: f32[1,768], index: 2, kind: input, shape index: {}]
  %s3 = inlined_call_operand.vmem [shape: f32[1,768], index: 3, kind: input, shape index: {}]
  %s4 = inlined_call_operand.hbm [shape: f32[48,768], index: 4, kind: input, shape index: {}]
  %s5 = inlined_call_operand.hbm [shape: f32[2,48,768], index: 5, kind: output, shape index: {}]
  %s6 = sld [smem:[#allocation0]]
  $region57: #{tpu_custom_call.1} parent=0
    _
  %s8 = ssub.s32 1, %s6
  %s9 = scalar_select 0, %s8, %s6
  $region1: #{tpu_custom_call.1} parent=0
    #allocation2 [shape = 'u8[147456]{0}', space=vmem, size = 0x24000, scoped, tag = 'input window, operand 4, single buffered']
    #allocation3 [shape = 's32[2]{0}', space=sflag, size = 0x8, scoped, tag = 'scoped memory for tpu_custom_call.1']
    #allocation4 [shape = 's32[2]{0}', space=sflag, size = 0x8, scoped, tag = 'scoped memory for tpu_custom_call.1']
    #allocation5 [shape = 'u8[294912]{0}', space=vmem, size = 0x48000, scoped, tag = 'output window, operand 0']
    %10 = vsyncpa [#allocation3], 0
    %11 = vsyncpa [#allocation4], 0
    %s12 = scalar_lea.sflag [#allocation4], 1
    %13 = vsyncpa %s12, 0
    loop: start=0, step=1, limit=4
    $region2: #{tpu_custom_call.1} parent=1 // loop_pre_header
      _
    $region3: #{tpu_custom_call.1} parent=1 // loop_header
      %s15 = sphi 0, %s19
      %p16 = scmp.ge.s32.totalorder %s15, 4
      %s22 = sphi 0, %s34
      %s23 = sphi 0, %s30
      %s24 = sphi 0, %s22
      %s25 = sphi 0, %s23
      %s26 = sphi 0, %s24
      %s27 = sphi 0, %s25
      %s39 = sphi 0, %s41
      %s42 = sphi 0, %s39
      %s43 = sphi 0, %s42
      %s59 = sphi 0, %s43
      %s63 = sphi 0, %s63
      %s65 = sphi 0, %s63
      %s66 = sphi 0, %s65
      %s80 = sphi 0, %s66
      %s84 = sphi 0, %s84
      %s86 = sphi 0, %s84
      %s87 = sphi 0, %s86
      %s101 = sphi 0, %s87
      %s105 = sphi 0, %s105
      %s107 = sphi 0, %s105
      %s108 = sphi 0, %s107
      %s122 = sphi 0, %s108
      %s128 = sphi 0, %s130
      %s131 = sphi 0, %s128
      %s132 = sphi 0, %s131
      %s148 = sphi 0, %s132
      %s156 = sphi 0, %s158
      %s159 = sphi 0, %s156
      %s160 = sphi 0, %s159
      %s176 = sphi 0, %s160
    $region4: #{tpu_custom_call.1} parent=1 // loop_header_branch
      %18 = sbr.rel (%p16) target = $region8
    $region5: #{tpu_custom_call.1} parent=1 // loop_body
      %s20 = ssub.s32 %s15, 1
      %s21 = ssub.s32 %s15, 2
      %s28 = sadd.s32 1, %s23
      %p29 = scmp.ge.s32.totalorder %s28, 2
      %s30 = scalar_select %p29, 0, %s28
      %s31 = sadd.s32 1, %s22
      %s32 = scalar_select %p29, %s31, %s22
      %p33 = scmp.ge.s32.totalorder %s32, 1
      %s34 = scalar_select %p33, 0, %s32
      %s35 = ssub.s32 %s23, %s30
      %s36 = ssub.s32 %s22, %s34
      %s37 = sor.u32 %s35, %s36
      %p38 = scmp.eq.s32.totalorder %s37, 0
      %s40 = sadd.s32 %s39, 1
      %s41 = scalar_select %p38, %s39, %s40
      %p44 = pneg %p38
      %p45 = scmp.eq.s32.totalorder %s15, 1
      %p46 = por %p44, %p45
      %p47 = scmp.ne.s32.totalorder %s39, %s42
      %p48 = scmp.eq.s32.totalorder %s15, 0
      %p49 = por %p47, %p48
      %p50 = scmp.ne.s32.totalorder %s39, %s42
      %p51 = scmp.eq.s32.totalorder %s20, 1
      %p52 = por %p50, %p51
      %p53 = scmp.ne.s32.totalorder %s42, %s43
      %p54 = scmp.eq.s32.totalorder %s20, 0
      %p55 = por %p53, %p54
      %p56 = scmp.ne.s32.totalorder %s42, %s43
      %p57 = scmp.eq.s32.totalorder %s21, 1
      %p58 = por %p56, %p57
      %p60 = scmp.ne.s32.totalorder %s43, %s59
      %p61 = scmp.eq.s32.totalorder %s21, 0
      %p62 = por %p60, %p61
      %s64 = sadd.s32 %s63, 1
      %p67 = scmp.eq.s32.totalorder %s15, 1
      %p68 = scmp.ne.s32.totalorder %s63, %s65
      %p69 = scmp.eq.s32.totalorder %s15, 0
      %p70 = por %p68, %p69
      %p71 = scmp.ne.s32.totalorder %s63, %s65
      %p72 = scmp.eq.s32.totalorder %s20, 1
      %p73 = por %p71, %p72
      %p74 = scmp.ne.s32.totalorder %s65, %s66
      %p75 = scmp.eq.s32.totalorder %s20, 0
      %p76 = por %p74, %p75
      %p77 = scmp.ne.s32.totalorder %s65, %s66
      %p78 = scmp.eq.s32.totalorder %s21, 1
      %p79 = por %p77, %p78
      %p81 = scmp.ne.s32.totalorder %s66, %s80
      %p82 = scmp.eq.s32.totalorder %s21, 0
      %p83 = por %p81, %p82
      %s85 = sadd.s32 %s84, 1
      %p88 = scmp.eq.s32.totalorder %s15, 1
      %p89 = scmp.ne.s32.totalorder %s84, %s86
      %p90 = scmp.eq.s32.totalorder %s15, 0
      %p91 = por %p89, %p90
      %p92 = scmp.ne.s32.totalorder %s84, %s86
      %p93 = scmp.eq.s32.totalorder %s20, 1
      %p94 = por %p92, %p93
      %p95 = scmp.ne.s32.totalorder %s86, %s87
      %p96 = scmp.eq.s32.totalorder %s20, 0
      %p97 = por %p95, %p96
      %p98 = scmp.ne.s32.totalorder %s86, %s87
      %p99 = scmp.eq.s32.totalorder %s21, 1
      %p100 = por %p98, %p99
      %p102 = scmp.ne.s32.totalorder %s87, %s101
      %p103 = scmp.eq.s32.totalorder %s21, 0
      %p104 = por %p102, %p103
      %s106 = sadd.s32 %s105, 1
      %p109 = scmp.eq.s32.totalorder %s15, 1
      %p110 = scmp.ne.s32.totalorder %s105, %s107
      %p111 = scmp.eq.s32.totalorder %s15, 0
      %p112 = por %p110, %p111
      %p113 = scmp.ne.s32.totalorder %s105, %s107
      %p114 = scmp.eq.s32.totalorder %s20, 1
      %p115 = por %p113, %p114
      %p116 = scmp.ne.s32.totalorder %s107, %s108
      %p117 = scmp.eq.s32.totalorder %s20, 0
      %p118 = por %p116, %p117
      %p119 = scmp.ne.s32.totalorder %s107, %s108
      %p120 = scmp.eq.s32.totalorder %s21, 1
      %p121 = por %p119, %p120
      %p123 = scmp.ne.s32.totalorder %s108, %s122
      %p124 = scmp.eq.s32.totalorder %s21, 0
      %p125 = por %p123, %p124
      %s126 = ssub.s32 %s22, %s34
      %p127 = scmp.eq.s32.totalorder %s126, 0
      %s129 = sadd.s32 %s128, 1
      %s130 = scalar_select %p127, %s128, %s129
      %p133 = pneg %p127
      %p134 = scmp.eq.s32.totalorder %s15, 1
      %p135 = por %p133, %p134
      %p136 = scmp.ne.s32.totalorder %s128, %s131
      %p137 = scmp.eq.s32.totalorder %s15, 0
      %p138 = por %p136, %p137
      %p139 = scmp.ne.s32.totalorder %s128, %s131
      %p140 = scmp.eq.s32.totalorder %s20, 1
      %p141 = por %p139, %p140
      %p142 = scmp.ne.s32.totalorder %s131, %s132
      %p143 = scmp.eq.s32.totalorder %s20, 0
      %p144 = por %p142, %p143
      %p145 = scmp.ne.s32.totalorder %s131, %s132
      %p146 = scmp.eq.s32.totalorder %s21, 1
      %p147 = por %p145, %p146
      %p149 = scmp.ne.s32.totalorder %s132, %s148
      %p150 = scmp.eq.s32.totalorder %s21, 0
      %p151 = por %p149, %p150
      %s152 = ssub.s32 %s23, %s30
      %s153 = ssub.s32 %s22, %s34
      %s154 = sor.u32 %s152, %s153
      %p155 = scmp.eq.s32.totalorder %s154, 0
      %s157 = sadd.s32 %s156, 1
      %s158 = scalar_select %p155, %s156, %s157
      %p161 = pneg %p155
      %p162 = scmp.eq.s32.totalorder %s15, 1
      %p163 = por %p161, %p162
      %p164 = scmp.ne.s32.totalorder %s156, %s159
      %p165 = scmp.eq.s32.totalorder %s15, 0
      %p166 = por %p164, %p165
      %p167 = scmp.ne.s32.totalorder %s156, %s159
      %p168 = scmp.eq.s32.totalorder %s20, 1
      %p169 = por %p167, %p168
      %p170 = scmp.ne.s32.totalorder %s159, %s160
      %p171 = scmp.eq.s32.totalorder %s20, 0
      %p172 = por %p170, %p171
      %p173 = scmp.ne.s32.totalorder %s159, %s160
      %p174 = scmp.eq.s32.totalorder %s21, 1
      %p175 = por %p173, %p174
      %p177 = scmp.ne.s32.totalorder %s160, %s176
      %p178 = scmp.eq.s32.totalorder %s21, 0
      %p179 = por %p177, %p178
      %p180 = scmp.le.s32.totalorder 1, %s15
      %p181 = scmp.lt.s32.totalorder %s15, 3
      %p182 = pnand %p180, %p181
      %p183 = pneg %p182
      // Predicated region
      $region9: #{tpu_custom_call.1} parent=5 // pred_check
        _
      $region10: #{tpu_custom_call.1} parent=5 // pred_check_branch
        %185 = sbr.rel (%p182) target = $region12
      $region11: #{tpu_custom_call.1} parent=5 // pred_region
        %s186 = ssub.s32 %s15, 1
        // Predicated region
        $region13: #{tpu_custom_call.1} parent=11 // pred_check
          %p187 = pneg %p76
        $region14: #{tpu_custom_call.1} parent=11 // pred_check_branch
          %189 = sbr.rel (%p187) target = $region16
        $region15: #{tpu_custom_call.1} parent=11 // pred_region
          _
        $region16: #{tpu_custom_call.1} parent=11 // pred_fallthru
          _
        // Predicated region
        $region17: #{tpu_custom_call.1} parent=11 // pred_check
          %p190 = pneg %p97
        $region18: #{tpu_custom_call.1} parent=11 // pred_check_branch
          %192 = sbr.rel (%p190) target = $region20
        $region19: #{tpu_custom_call.1} parent=11 // pred_region
          _
        $region20: #{tpu_custom_call.1} parent=11 // pred_fallthru
          _
        // Predicated region
        $region21: #{tpu_custom_call.1} parent=11 // pred_check
          %p193 = pneg %p118
        $region22: #{tpu_custom_call.1} parent=11 // pred_check_branch
          %195 = sbr.rel (%p193) target = $region24
        $region23: #{tpu_custom_call.1} parent=11 // pred_region
          _
        $region24: #{tpu_custom_call.1} parent=11 // pred_fallthru
          _
        // Predicated region
        $region25: #{tpu_custom_call.1} parent=11 // pred_check
          %p196 = pneg %p144
        $region26: #{tpu_custom_call.1} parent=11 // pred_check_branch
          %198 = sbr.rel (%p196) target = $region28
        $region27: #{tpu_custom_call.1} parent=11 // pred_region
          %s199 = smul.u32 6, %s24
          %s201 = ssub.s32 4608, 4608
          %202 = vsyncadd [#allocation3], %s201
          %s203 = smul.addr %s199, 6
          %s204 = smul.addr %s203, 128
          %s205 = scalar_lea.hbm %s4, %s204
          %s206 = sshll.u32 [#allocation2], 4
          %s207 = int_to_ptr.vmem [resolvable:$true] %s206
          %212 = dma.hbm_to_vmem [thread:$0]  %s205, 4608, %s207, [#allocation3], 768, 768, 48
        $region28: #{tpu_custom_call.1} parent=11 // pred_fallthru
          _
      $region12: #{tpu_custom_call.1} parent=5 // pred_fallthru
        _
      %p213 = scmp.lt.s32.totalorder %s15, 2
      // Predicated region
      $region29: #{tpu_custom_call.1} parent=5 // pred_check
        %p214 = pneg %p213
      $region30: #{tpu_custom_call.1} parent=5 // pred_check_branch
        %216 = sbr.rel (%p214) target = $region32
      $region31: #{tpu_custom_call.1} parent=5 // pred_region
        // Predicated region
        $region33: #{tpu_custom_call.1} parent=31 // pred_check
          %p217 = pneg %p49
        $region34: #{tpu_custom_call.1} parent=31 // pred_check_branch
          %219 = sbr.rel (%p217) target = $region36
        $region35: #{tpu_custom_call.1} parent=31 // pred_region
          %s220 = smul.u32 6, %s22
          %p221 = scmp.lt.s32.totalorder %s23, 1
          %s222 = scalar_select %p221, %s23, 1
          %p223 = scmp.lt.s32.totalorder %s220, 5
          %s224 = scalar_select %p223, %s220, 5
          %s225 = smul.addr %s222, 6
          %s226 = sadd.s32 %s224, %s225
          %s227 = smul.addr %s226, 8
          %s228 = scalar_lea.vmem %s0, %s227
          %s229 = smul.u32 6, %s22
        $region36: #{tpu_custom_call.1} parent=31 // pred_fallthru
          _
      $region32: #{tpu_custom_call.1} parent=5 // pred_fallthru
        _
      %p230 = scmp.le.s32.totalorder 1, %s15
      %p231 = scmp.lt.s32.totalorder %s15, 3
      %p232 = pnand %p230, %p231
      %p233 = pneg %p232
      // Predicated region
      $region37: #{tpu_custom_call.1} parent=5 // pred_check
        _
      $region38: #{tpu_custom_call.1} parent=5 // pred_check_branch
        %235 = sbr.rel (%p232) target = $region40
      $region39: #{tpu_custom_call.1} parent=5 // pred_region
        %s236 = ssub.s32 %s15, 1
        // Predicated region
        $region41: #{tpu_custom_call.1} parent=39 // pred_check
          %p237 = pneg %p144
        $region42: #{tpu_custom_call.1} parent=39 // pred_check_branch
          %239 = sbr.rel (%p237) target = $region44
        $region43: #{tpu_custom_call.1} parent=39 // pred_region
          %240 = dma.done [#allocation3], 4608
        $region44: #{tpu_custom_call.1} parent=39 // pred_fallthru
          _
        %s241 = smul.u32 6, %s24
        %p242 = scmp.lt.s32.totalorder %s25, 1
        %s243 = scalar_select %p242, %s25, 1
        %p244 = scmp.lt.s32.totalorder %s241, 5
        %s245 = scalar_select %p244, %s241, 5
        %s246 = smul.addr %s243, 6
        %s247 = sadd.s32 %s245, %s246
        %s248 = smul.addr %s247, 8
        %s249 = scalar_lea.vmem %s0, %s248
        %p250 = pneg %p55
        %p251 = pneg %p52
        %p252 = pneg %p76
        %p253 = pneg %p73
        %p254 = pneg %p97
        %p255 = pneg %p94
        %p256 = pneg %p118
        %p257 = pneg %p115
        %p258 = pneg %p144
        %p259 = pneg %p141
        %p260 = pneg %p172
        %p261 = pneg %p169
        %s262 = sand.u32 %s159, 1
        %s263 = scalar_lea.sflag [#allocation4], %s262
        %s264 = sand.u32 %s159, 1
        %s265 = smul.addr %s264, 288
        %s266 = scalar_lea.vmem [#allocation5], %s265
        %s267 = smul.u32 6, %s24
        %p268 = scmp.lt.s32.totalorder %s25, 1
        %s269 = scalar_select %p268, %s25, 1
        %p270 = scmp.lt.s32.totalorder %s267, 5
        %s271 = scalar_select %p270, %s267, 5
        %s272 = smul.addr %s269, 6
        %s273 = sadd.s32 %s271, %s272
        %s274 = smul.addr %s273, 8
        %s275 = scalar_lea.vmem %s0, %s274
        %s276 = smul.u32 6, %s24
        %s277 = smul.u32 6, %s24
        %s278 = smul.u32 6, %s24
        %v279 = vld [vmem:[%s275] sm:$0xff]
        %v280 = vld [vmem:[%s275 + $0x8] sm:$0xff]
        %v281 = vld [vmem:[%s275 + $0x10] sm:$0xff]
        %v282 = vld [vmem:[%s275 + $0x18] sm:$0xff]
        %v283 = vld [vmem:[%s275 + $0x20] sm:$0xff]
        %v284 = vld [vmem:[%s275 + $0x28] sm:$0xff]
        %v285 = vld [vmem:[%s1] sm:$0xff]
        %v286 = vld [vmem:[%s1 + $0x8] sm:$0xff]
        %v287 = vld [vmem:[%s1 + $0x10] sm:$0xff]
        %v288 = vld [vmem:[%s1 + $0x18] sm:$0xff]
        %v289 = vld [vmem:[%s1 + $0x20] sm:$0xff]
        %v290 = vld [vmem:[%s1 + $0x28] sm:$0xff]
        %v291 = vld [vmem:[%s2] sm:$0x3f]
        %v293 = vlaneseq
        %v294 = vshrl.u32 %v293, 7
        %v295 = vsub.s32 0, %v294
        %v296 = vrot.slane %v291, %v295
        %v297 = vlaneseq
        %v298 = vshrl.u32 %v297, 7
        %v299 = vsub.s32 1, %v298
        %v300 = vrot.slane %v291, %v299
        %v301 = vlaneseq
        %v302 = vshrl.u32 %v301, 7
        %v303 = vsub.s32 2, %v302
        %v304 = vrot.slane %v291, %v303
        %v305 = vlaneseq
        %v306 = vshrl.u32 %v305, 7
        %v307 = vsub.s32 3, %v306
        %v308 = vrot.slane %v291, %v307
        %v309 = vlaneseq
        %v310 = vshrl.u32 %v309, 7
        %v311 = vsub.s32 4, %v310
        %v312 = vrot.slane %v291, %v311
        %v313 = vlaneseq
        %v314 = vshrl.u32 %v313, 7
        %v315 = vsub.s32 5, %v314
        %v316 = vrot.slane %v291, %v315
        %vm323 = vcmask 64512
        %v325 = vsel %vm323, %v279, 0
        %v328 = vsel %vm323, %v280, 0
        %v331 = vsel %vm323, %v281, 0
        %v334 = vsel %vm323, %v282, 0
        %v337 = vsel %vm323, %v283, 0
        %v340 = vsel %vm323, %v284, 0
        %342 = vmatprep.subr.mxu0 %v286
        %343 = vmatpush1.msra.mxu0 %v285
        %344 = vmatprep.subr.mxu0 0.0
        %345 = vmatpush1.msra.mxu0 0.0
        %346 = vmatprep.subr.mxu0 0.0
        %347 = vmatpush1.msra.mxu0 0.0
        %348 = vmatprep.subr.mxu0 0.0
        %349 = vmatpush1.msra.mxu0 0.0
        %350 = vmatprep.subr.mxu0 0.0
        %351 = vmatpush1.msra.mxu0 0.0
        %352 = vmatprep.subr.mxu0 0.0
        %353 = vmatpush1.msra.mxu0 0.0
        %354 = vmatprep.subr.mxu0 0.0
        %355 = vmatpush1.msra.mxu0 0.0
        %356 = vmatprep.subr.mxu0 0.0
        %357 = vmatpush1.msra.mxu0 0.0
        %358 = vmatprep.subr.mxu0 0.0
        %359 = vmatpush1.msra.mxu0 0.0
        %360 = vmatprep.subr.mxu0 0.0
        %361 = vmatpush1.msra.mxu0 0.0
        %362 = vmatprep.subr.mxu0 0.0
        %363 = vmatpush1.msra.mxu0 0.0
        %364 = vmatprep.subr.mxu0 0.0
        %365 = vmatpush1.msra.mxu0 0.0
        %366 = vmatprep.subr.mxu0 0.0
        %367 = vmatpush1.msra.mxu0 0.0
        %368 = vmatprep.subr.mxu0 0.0
        %369 = vmatpush1.msra.mxu0 0.0
        %370 = vmatprep.subr.mxu0 0.0
        %371 = vmatpush1.msra.mxu0 0.0
        %372 = vmatprep.subr.mxu0 0.0
        %373 = vmatpush1.msra.mxu0 0.0
        %374 = vmatprep.subr.mxu0 0.0
        %375 = vmatpush1.msra.mxu0 0.0
        %376 = vmatprep.subr.mxu0 0.0
        %377 = vmatpush1.msra.mxu0 0.0
        %378 = vmatprep.subr.mxu0 0.0
        %379 = vmatpush1.msra.mxu0 0.0
        %380 = vmatprep.subr.mxu0 0.0
        %381 = vmatpush1.msra.mxu0 0.0
        %382 = vmatprep.subr.mxu0 0.0
        %383 = vmatpush1.msra.mxu0 0.0
        %384 = vmatprep.subr.mxu0 0.0
        %385 = vmatpush1.msra.mxu0 0.0
        %386 = vmatprep.subr.mxu0 0.0
        %387 = vmatpush1.msra.mxu0 0.0
        %388 = vmatprep.subr.mxu0 0.0
        %389 = vmatpush1.msra.mxu0 0.0
        %390 = vmatprep.subr.mxu0 0.0
        %391 = vmatpush1.msra.mxu0 0.0
        %392 = vmatprep.subr.mxu0 0.0
        %393 = vmatpush1.msra.mxu0 0.0
        %394 = vmatprep.subr.mxu0 0.0
        %395 = vmatpush1.msra.mxu0 0.0
        %396 = vmatprep.subr.mxu0 0.0
        %397 = vmatpush1.msra.mxu0 0.0
        %398 = vmatprep.subr.mxu0 0.0
        %399 = vmatpush1.msra.mxu0 0.0
        %400 = vmatprep.subr.mxu0 0.0
        %401 = vmatpush1.msra.mxu0 0.0
        %402 = vmatprep.subr.mxu0 0.0
        %403 = vmatpush1.msra.mxu0 0.0
        %404 = vmatprep.subr.mxu0 0.0
        %405 = vmatpush1.msra.mxu0 0.0
        %406 = vmatprep.mubr.f32.mxu0 0.0
        %407 = vmatmul.mubr.f32.gmra.mrb[0].mxu0 %v325
        %v408 = vpop.f32.mrb[0].mxu0
        %v409 = vadd.f32 %v296, %v408
        %v410 = vpop.f32.mrb[0].mxu0
        %v411 = vadd.f32 %v300, %v410
        %412 = vmatprep.mubr.f32.mxu0 0.0
        %413 = vmatmul.mubr.f32.gmra.mrb[0].mxu0 %v328
        %v414 = vpop.f32.mrb[0].mxu0
        %v415 = vadd.f32 %v296, %v414
        %v416 = vpop.f32.mrb[0].mxu0
        %v417 = vadd.f32 %v300, %v416
        %418 = vmatprep.mubr.f32.mxu0 0.0
        %419 = vmatmul.mubr.f32.gmra.mrb[0].mxu0 %v331
        %v420 = vpop.f32.mrb[0].mxu0
        %v421 = vadd.f32 %v296, %v420
        %v422 = vpop.f32.mrb[0].mxu0
        %v423 = vadd.f32 %v300, %v422
        %424 = vmatprep.mubr.f32.mxu0 0.0
        %425 = vmatmul.mubr.f32.gmra.mrb[0].mxu0 %v334
        %v426 = vpop.f32.mrb[0].mxu0
        %v427 = vadd.f32 %v296, %v426
        %v428 = vpop.f32.mrb[0].mxu0
        %v429 = vadd.f32 %v300, %v428
        %430 = vmatprep.mubr.f32.mxu0 0.0
        %431 = vmatmul.mubr.f32.gmra.mrb[0].mxu0 %v337
        %v432 = vpop.f32.mrb[0].mxu0
        %v433 = vadd.f32 %v296, %v432
        %v434 = vpop.f32.mrb[0].mxu0
        %v435 = vadd.f32 %v300, %v434
        %436 = vmatprep.mubr.f32.mxu0 0.0
        %437 = vmatmul.mubr.f32.gmra.mrb[0].mxu0 %v340
        %v438 = vpop.f32.mrb[0].mxu0
        %v439 = vadd.f32 %v296, %v438
        %v440 = vpop.f32.mrb[0].mxu0
        %v441 = vadd.f32 %v300, %v440
        %442 = vdwg.mxu0
        %443 = vmatprep.subr.mxu0 %v288
        %444 = vmatpush1.msra.mxu0 %v287
        %445 = vmatprep.subr.mxu0 0.0
        %446 = vmatpush1.msra.mxu0 0.0
        %447 = vmatprep.subr.mxu0 0.0
        %448 = vmatpush1.msra.mxu0 0.0
        %449 = vmatprep.subr.mxu0 0.0
        %450 = vmatpush1.msra.mxu0 0.0
        %451 = vmatprep.subr.mxu0 0.0
        %452 = vmatpush1.msra.mxu0 0.0
        %453 = vmatprep.subr.mxu0 0.0
        %454 = vmatpush1.msra.mxu0 0.0
        %455 = vmatprep.subr.mxu0 0.0
        %456 = vmatpush1.msra.mxu0 0.0
        %457 = vmatprep.subr.mxu0 0.0
        %458 = vmatpush1.msra.mxu0 0.0
        %459 = vmatprep.subr.mxu0 0.0
        %460 = vmatpush1.msra.mxu0 0.0
        %461 = vmatprep.subr.mxu0 0.0
        %462 = vmatpush1.msra.mxu0 0.0
        %463 = vmatprep.subr.mxu0 0.0
        %464 = vmatpush1.msra.mxu0 0.0
        %465 = vmatprep.subr.mxu0 0.0
        %466 = vmatpush1.msra.mxu0 0.0
        %467 = vmatprep.subr.mxu0 0.0
        %468 = vmatpush1.msra.mxu0 0.0
        %469 = vmatprep.subr.mxu0 0.0
        %470 = vmatpush1.msra.mxu0 0.0
        %471 = vmatprep.subr.mxu0 0.0
        %472 = vmatpush1.msra.mxu0 0.0
        %473 = vmatprep.subr.mxu0 0.0
        %474 = vmatpush1.msra.mxu0 0.0
        %475 = vmatprep.subr.mxu0 0.0
        %476 = vmatpush1.msra.mxu0 0.0
        %477 = vmatprep.subr.mxu0 0.0
        %478 = vmatpush1.msra.mxu0 0.0
        %479 = vmatprep.subr.mxu0 0.0
        %480 = vmatpush1.msra.mxu0 0.0
        %481 = vmatprep.subr.mxu0 0.0
        %482 = vmatpush1.msra.mxu0 0.0
        %483 = vmatprep.subr.mxu0 0.0
        %484 = vmatpush1.msra.mxu0 0.0
        %485 = vmatprep.subr.mxu0 0.0
        %486 = vmatpush1.msra.mxu0 0.0
        %487 = vmatprep.subr.mxu0 0.0
        %488 = vmatpush1.msra.mxu0 0.0
        %489 = vmatprep.subr.mxu0 0.0
        %490 = vmatpush1.msra.mxu0 0.0
        %491 = vmatprep.subr.mxu0 0.0
        %492 = vmatpush1.msra.mxu0 0.0
        %493 = vmatprep.subr.mxu0 0.0
        %494 = vmatpush1.msra.mxu0 0.0
        %495 = vmatprep.subr.mxu0 0.0
        %496 = vmatpush1.msra.mxu0 0.0
        %497 = vmatprep.subr.mxu0 0.0
        %498 = vmatpush1.msra.mxu0 0.0
        %499 = vmatprep.subr.mxu0 0.0
        %500 = vmatpush1.msra.mxu0 0.0
        %501 = vmatprep.subr.mxu0 0.0
        %502 = vmatpush1.msra.mxu0 0.0
        %503 = vmatprep.subr.mxu0 0.0
        %504 = vmatpush1.msra.mxu0 0.0
        %505 = vmatprep.subr.mxu0 0.0
        %506 = vmatpush1.msra.mxu0 0.0
        %507 = vmatprep.mubr.f32.mxu0 0.0
        %508 = vmatmul.mubr.f32.gmra.mrb[0].mxu0 %v325
        %v509 = vpop.f32.mrb[0].mxu0
        %v510 = vadd.f32 %v304, %v509
        %v511 = vpop.f32.mrb[0].mxu0
        %v512 = vadd.f32 %v308, %v511
        %513 = vmatprep.mubr.f32.mxu0 0.0
        %514 = vmatmul.mubr.f32.gmra.mrb[0].mxu0 %v328
        %v515 = vpop.f32.mrb[0].mxu0
        %v516 = vadd.f32 %v304, %v515
        %v517 = vpop.f32.mrb[0].mxu0
        %v518 = vadd.f32 %v308, %v517
        %519 = vmatprep.mubr.f32.mxu0 0.0
        %520 = vmatmul.mubr.f32.gmra.mrb[0].mxu0 %v331
        %v521 = vpop.f32.mrb[0].mxu0
        %v522 = vadd.f32 %v304, %v521
        %v523 = vpop.f32.mrb[0].mxu0
        %v524 = vadd.f32 %v308, %v523
        %525 = vmatprep.mubr.f32.mxu0 0.0
        %526 = vmatmul.mubr.f32.gmra.mrb[0].mxu0 %v334
        %v527 = vpop.f32.mrb[0].mxu0
        %v528 = vadd.f32 %v304, %v527
        %v529 = vpop.f32.mrb[0].mxu0
        %v530 = vadd.f32 %v308, %v529
        %531 = vmatprep.mubr.f32.mxu0 0.0
        %532 = vmatmul.mubr.f32.gmra.mrb[0].mxu0 %v337
        %v533 = vpop.f32.mrb[0].mxu0
        %v534 = vadd.f32 %v304, %v533
        %v535 = vpop.f32.mrb[0].mxu0
        %v536 = vadd.f32 %v308, %v535
        %537 = vmatprep.mubr.f32.mxu0 0.0
        %538 = vmatmul.mubr.f32.gmra.mrb[0].mxu0 %v340
        %v539 = vpop.f32.mrb[0].mxu0
        %v540 = vadd.f32 %v304, %v539
        %v541 = vpop.f32.mrb[0].mxu0
        %v542 = vadd.f32 %v308, %v541
        %543 = vdwg.mxu0
        %544 = vmatprep.subr.mxu0 %v290
        %545 = vmatpush1.msra.mxu0 %v289
        %546 = vmatprep.subr.mxu0 0.0
        %547 = vmatpush1.msra.mxu0 0.0
        %548 = vmatprep.subr.mxu0 0.0
        %549 = vmatpush1.msra.mxu0 0.0
        %550 = vmatprep.subr.mxu0 0.0
        %551 = vmatpush1.msra.mxu0 0.0
        %552 = vmatprep.subr.mxu0 0.0
        %553 = vmatpush1.msra.mxu0 0.0
        %554 = vmatprep.subr.mxu0 0.0
        %555 = vmatpush1.msra.mxu0 0.0
        %556 = vmatprep.subr.mxu0 0.0
        %557 = vmatpush1.msra.mxu0 0.0
        %558 = vmatprep.subr.mxu0 0.0
        %559 = vmatpush1.msra.mxu0 0.0
        %560 = vmatprep.subr.mxu0 0.0
        %561 = vmatpush1.msra.mxu0 0.0
        %562 = vmatprep.subr.mxu0 0.0
        %563 = vmatpush1.msra.mxu0 0.0
        %564 = vmatprep.subr.mxu0 0.0
        %565 = vmatpush1.msra.mxu0 0.0
        %566 = vmatprep.subr.mxu0 0.0
        %567 = vmatpush1.msra.mxu0 0.0
        %568 = vmatprep.subr.mxu0 0.0
        %569 = vmatpush1.msra.mxu0 0.0
        %570 = vmatprep.subr.mxu0 0.0
        %571 = vmatpush1.msra.mxu0 0.0
        %572 = vmatprep.subr.mxu0 0.0
        %573 = vmatpush1.msra.mxu0 0.0
        %574 = vmatprep.subr.mxu0 0.0
        %575 = vmatpush1.msra.mxu0 0.0
        %576 = vmatprep.subr.mxu0 0.0
        %577 = vmatpush1.msra.mxu0 0.0
        %578 = vmatprep.subr.mxu0 0.0
        %579 = vmatpush1.msra.mxu0 0.0
        %580 = vmatprep.subr.mxu0 0.0
        %581 = vmatpush1.msra.mxu0 0.0
        %582 = vmatprep.subr.mxu0 0.0
        %583 = vmatpush1.msra.mxu0 0.0
        %584 = vmatprep.subr.mxu0 0.0
        %585 = vmatpush1.msra.mxu0 0.0
        %586 = vmatprep.subr.mxu0 0.0
        %587 = vmatpush1.msra.mxu0 0.0
        %588 = vmatprep.subr.mxu0 0.0
        %589 = vmatpush1.msra.mxu0 0.0
        %590 = vmatprep.subr.mxu0 0.0
        %591 = vmatpush1.msra.mxu0 0.0
        %592 = vmatprep.subr.mxu0 0.0
        %593 = vmatpush1.msra.mxu0 0.0
        %594 = vmatprep.subr.mxu0 0.0
        %595 = vmatpush1.msra.mxu0 0.0
        %596 = vmatprep.subr.mxu0 0.0
        %597 = vmatpush1.msra.mxu0 0.0
        %598 = vmatprep.subr.mxu0 0.0
        %599 = vmatpush1.msra.mxu0 0.0
        %600 = vmatprep.subr.mxu0 0.0
        %601 = vmatpush1.msra.mxu0 0.0
        %602 = vmatprep.subr.mxu0 0.0
        %603 = vmatpush1.msra.mxu0 0.0
        %604 = vmatprep.subr.mxu0 0.0
        %605 = vmatpush1.msra.mxu0 0.0
        %606 = vmatprep.subr.mxu0 0.0
        %607 = vmatpush1.msra.mxu0 0.0
        %608 = vmatprep.mubr.f32.mxu0 0.0
        %609 = vmatmul.mubr.f32.gmra.mrb[0].mxu0 %v325
        %v610 = vpop.f32.mrb[0].mxu0
        %v611 = vadd.f32 %v312, %v610
        %v612 = vpop.f32.mrb[0].mxu0
        %v613 = vadd.f32 %v316, %v612
        %614 = vmatprep.mubr.f32.mxu0 0.0
        %615 = vmatmul.mubr.f32.gmra.mrb[0].mxu0 %v328
        %v616 = vpop.f32.mrb[0].mxu0
        %v617 = vadd.f32 %v312, %v616
        %v618 = vpop.f32.mrb[0].mxu0
        %v619 = vadd.f32 %v316, %v618
        %620 = vmatprep.mubr.f32.mxu0 0.0
        %621 = vmatmul.mubr.f32.gmra.mrb[0].mxu0 %v331
        %v622 = vpop.f32.mrb[0].mxu0
        %v623 = vadd.f32 %v312, %v622
        %v624 = vpop.f32.mrb[0].mxu0
        %v625 = vadd.f32 %v316, %v624
        %626 = vmatprep.mubr.f32.mxu0 0.0
        %627 = vmatmul.mubr.f32.gmra.mrb[0].mxu0 %v334
        %v628 = vpop.f32.mrb[0].mxu0
        %v629 = vadd.f32 %v312, %v628
        %v630 = vpop.f32.mrb[0].mxu0
        %v631 = vadd.f32 %v316, %v630
        %632 = vmatprep.mubr.f32.mxu0 0.0
        %633 = vmatmul.mubr.f32.gmra.mrb[0].mxu0 %v337
        %v634 = vpop.f32.mrb[0].mxu0
        %v635 = vadd.f32 %v312, %v634
        %v636 = vpop.f32.mrb[0].mxu0
        %v637 = vadd.f32 %v316, %v636
        %638 = vmatprep.mubr.f32.mxu0 0.0
        %639 = vmatmul.mubr.f32.gmra.mrb[0].mxu0 %v340
        %v640 = vpop.f32.mrb[0].mxu0
        %v641 = vadd.f32 %v312, %v640
        %v642 = vpop.f32.mrb[0].mxu0
        %v643 = vadd.f32 %v316, %v642
        %644 = vdwg.mxu0
        %v645 = vadd.f32 %v409, %v411
        %v646 = vadd.f32 %v645, %v510
        %v647 = vadd.f32 %v646, %v512
        %v648 = vadd.f32 %v647, %v611
        %v649 = vadd.f32 %v648, %v613
        %650 = vadd.xlane.f32.xlu0 %v649
        %v651 = vpop.xlane.xlu0 %650
        %v652 = vadd.f32 %v415, %v417
        %v653 = vadd.f32 %v652, %v516
        %v654 = vadd.f32 %v653, %v518
        %v655 = vadd.f32 %v654, %v617
        %v656 = vadd.f32 %v655, %v619
        %657 = vadd.xlane.f32.xlu0 %v656
        %v658 = vpop.xlane.xlu0 %657
        %v659 = vadd.f32 %v421, %v423
        %v660 = vadd.f32 %v659, %v522
        %v661 = vadd.f32 %v660, %v524
        %v662 = vadd.f32 %v661, %v623
        %v663 = vadd.f32 %v662, %v625
        %664 = vadd.xlane.f32.xlu0 %v663
        %v665 = vpop.xlane.xlu0 %664
        %v666 = vadd.f32 %v427, %v429
        %v667 = vadd.f32 %v666, %v528
        %v668 = vadd.f32 %v667, %v530
        %v669 = vadd.f32 %v668, %v629
        %v670 = vadd.f32 %v669, %v631
        %671 = vadd.xlane.f32.xlu0 %v670
        %v672 = vpop.xlane.xlu0 %671
        %v673 = vadd.f32 %v433, %v435
        %v674 = vadd.f32 %v673, %v534
        %v675 = vadd.f32 %v674, %v536
        %v676 = vadd.f32 %v675, %v635
        %v677 = vadd.f32 %v676, %v637
        %678 = vadd.xlane.f32.xlu0 %v677
        %v679 = vpop.xlane.xlu0 %678
        %v680 = vadd.f32 %v439, %v441
        %v681 = vadd.f32 %v680, %v540
        %v682 = vadd.f32 %v681, %v542
        %v683 = vadd.f32 %v682, %v641
        %v684 = vadd.f32 %v683, %v643
        %685 = vadd.xlane.f32.xlu0 %v684
        %v686 = vpop.xlane.xlu0 %685
        %v687 = vmul.f32 %v651, 0.0013020834
        %v688 = vmul.f32 %v658, 0.0013020834
        %v689 = vmul.f32 %v665, 0.0013020834
        %v690 = vmul.f32 %v672, 0.0013020834
        %v691 = vmul.f32 %v679, 0.0013020834
        %v692 = vmul.f32 %v686, 0.0013020834
        %v693 = vmul.f32 %v409, %v409
        %v694 = vmul.f32 %v411, %v411
        %v695 = vmul.f32 %v510, %v510
        %v696 = vmul.f32 %v512, %v512
        %v697 = vmul.f32 %v611, %v611
        %v698 = vmul.f32 %v613, %v613
        %v699 = vmul.f32 %v415, %v415
        %v700 = vmul.f32 %v417, %v417
        %v701 = vmul.f32 %v516, %v516
        %v702 = vmul.f32 %v518, %v518
        %v703 = vmul.f32 %v617, %v617
        %v704 = vmul.f32 %v619, %v619
        %v705 = vmul.f32 %v421, %v421
        %v706 = vmul.f32 %v423, %v423
        %v707 = vmul.f32 %v522, %v522
        %v708 = vmul.f32 %v524, %v524
        %v709 = vmul.f32 %v623, %v623
        %v710 = vmul.f32 %v625, %v625
        %v711 = vmul.f32 %v427, %v427
        %v712 = vmul.f32 %v429, %v429
        %v713 = vmul.f32 %v528, %v528
        %v714 = vmul.f32 %v530, %v530
        %v715 = vmul.f32 %v629, %v629
        %v716 = vmul.f32 %v631, %v631
        %v717 = vmul.f32 %v433, %v433
        %v718 = vmul.f32 %v435, %v435
        %v719 = vmul.f32 %v534, %v534
        %v720 = vmul.f32 %v536, %v536
        %v721 = vmul.f32 %v635, %v635
        %v722 = vmul.f32 %v637, %v637
        %v723 = vmul.f32 %v439, %v439
        %v724 = vmul.f32 %v441, %v441
        %v725 = vmul.f32 %v540, %v540
        %v726 = vmul.f32 %v542, %v542
        %v727 = vmul.f32 %v641, %v641
        %v728 = vmul.f32 %v643, %v643
        %v729 = vadd.f32 %v693, %v694
        %v730 = vadd.f32 %v729, %v695
        %v731 = vadd.f32 %v730, %v696
        %v732 = vadd.f32 %v731, %v697
        %v733 = vadd.f32 %v732, %v698
        %734 = vadd.xlane.f32.xlu0 %v733
        %v735 = vpop.xlane.xlu0 %734
        %v736 = vadd.f32 %v699, %v700
        %v737 = vadd.f32 %v736, %v701
        %v738 = vadd.f32 %v737, %v702
        %v739 = vadd.f32 %v738, %v703
        %v740 = vadd.f32 %v739, %v704
        %741 = vadd.xlane.f32.xlu0 %v740
        %v742 = vpop.xlane.xlu0 %741
        %v743 = vadd.f32 %v705, %v706
        %v744 = vadd.f32 %v743, %v707
        %v745 = vadd.f32 %v744, %v708
        %v746 = vadd.f32 %v745, %v709
        %v747 = vadd.f32 %v746, %v710
        %748 = vadd.xlane.f32.xlu0 %v747
        %v749 = vpop.xlane.xlu0 %748
        %v750 = vadd.f32 %v711, %v712
        %v751 = vadd.f32 %v750, %v713
        %v752 = vadd.f32 %v751, %v714
        %v753 = vadd.f32 %v752, %v715
        %v754 = vadd.f32 %v753, %v716
        %755 = vadd.xlane.f32.xlu0 %v754
        %v756 = vpop.xlane.xlu0 %755
        %v757 = vadd.f32 %v717, %v718
        %v758 = vadd.f32 %v757, %v719
        %v759 = vadd.f32 %v758, %v720
        %v760 = vadd.f32 %v759, %v721
        %v761 = vadd.f32 %v760, %v722
        %762 = vadd.xlane.f32.xlu0 %v761
        %v763 = vpop.xlane.xlu0 %762
        %v764 = vadd.f32 %v723, %v724
        %v765 = vadd.f32 %v764, %v725
        %v766 = vadd.f32 %v765, %v726
        %v767 = vadd.f32 %v766, %v727
        %v768 = vadd.f32 %v767, %v728
        %769 = vadd.xlane.f32.xlu0 %v768
        %v770 = vpop.xlane.xlu0 %769
        %v771 = vmul.f32 %v735, 0.0013020834
        %v772 = vmul.f32 %v742, 0.0013020834
        %v773 = vmul.f32 %v749, 0.0013020834
        %v774 = vmul.f32 %v756, 0.0013020834
        %v775 = vmul.f32 %v763, 0.0013020834
        %v776 = vmul.f32 %v770, 0.0013020834
        %v777 = vmul.f32 %v687, %v687
        %v778 = vmul.f32 %v688, %v688
        %v779 = vmul.f32 %v689, %v689
        %v780 = vmul.f32 %v690, %v690
        %v781 = vmul.f32 %v691, %v691
        %v782 = vmul.f32 %v692, %v692
        %v783 = vsub.f32 %v771, %v777
        %v784 = vsub.f32 %v772, %v778
        %v785 = vsub.f32 %v773, %v779
        %v786 = vsub.f32 %v774, %v780
        %v787 = vsub.f32 %v775, %v781
        %v788 = vsub.f32 %v776, %v782
        %v789 = vsub.f32 %v409, %v687
        %v790 = vsub.f32 %v411, %v687
        %v791 = vsub.f32 %v510, %v687
        %v792 = vsub.f32 %v512, %v687
        %v793 = vsub.f32 %v611, %v687
        %v794 = vsub.f32 %v613, %v687
        %v795 = vsub.f32 %v415, %v688
        %v796 = vsub.f32 %v417, %v688
        %v797 = vsub.f32 %v516, %v688
        %v798 = vsub.f32 %v518, %v688
        %v799 = vsub.f32 %v617, %v688
        %v800 = vsub.f32 %v619, %v688
        %v801 = vsub.f32 %v421, %v689
        %v802 = vsub.f32 %v423, %v689
        %v803 = vsub.f32 %v522, %v689
        %v804 = vsub.f32 %v524, %v689
        %v805 = vsub.f32 %v623, %v689
        %v806 = vsub.f32 %v625, %v689
        %v807 = vsub.f32 %v427, %v690
        %v808 = vsub.f32 %v429, %v690
        %v809 = vsub.f32 %v528, %v690
        %v810 = vsub.f32 %v530, %v690
        %v811 = vsub.f32 %v629, %v690
        %v812 = vsub.f32 %v631, %v690
        %v813 = vsub.f32 %v433, %v691
        %v814 = vsub.f32 %v435, %v691
        %v815 = vsub.f32 %v534, %v691
        %v816 = vsub.f32 %v536, %v691
        %v817 = vsub.f32 %v635, %v691
        %v818 = vsub.f32 %v637, %v691
        %v819 = vsub.f32 %v439, %v692
        %v820 = vsub.f32 %v441, %v692
        %v821 = vsub.f32 %v540, %v692
        %v822 = vsub.f32 %v542, %v692
        %v823 = vsub.f32 %v641, %v692
        %v824 = vsub.f32 %v643, %v692
        %v825 = vadd.f32 %v783, 1e-05
        %v826 = vadd.f32 %v784, 1e-05
        %v827 = vadd.f32 %v785, 1e-05
        %v828 = vadd.f32 %v786, 1e-05
        %v829 = vadd.f32 %v787, 1e-05
        %v830 = vadd.f32 %v788, 1e-05
        %v831 = vrsqrt.pop %v825
        %v832 = vrsqrt.pop %v826
        %v833 = vrsqrt.pop %v827
        %v834 = vrsqrt.pop %v828
        %v835 = vrsqrt.pop %v829
        %v836 = vrsqrt.pop %v830
        %v837 = vmul.f32 %v789, %v831
        %v838 = vmul.f32 %v790, %v831
        %v839 = vmul.f32 %v791, %v831
        %v840 = vmul.f32 %v792, %v831
        %v841 = vmul.f32 %v793, %v831
        %v842 = vmul.f32 %v794, %v831
        %v843 = vmul.f32 %v795, %v832
        %v844 = vmul.f32 %v796, %v832
        %v845 = vmul.f32 %v797, %v832
        %v846 = vmul.f32 %v798, %v832
        %v847 = vmul.f32 %v799, %v832
        %v848 = vmul.f32 %v800, %v832
        %v849 = vmul.f32 %v801, %v833
        %v850 = vmul.f32 %v802, %v833
        %v851 = vmul.f32 %v803, %v833
        %v852 = vmul.f32 %v804, %v833
        %v853 = vmul.f32 %v805, %v833
        %v854 = vmul.f32 %v806, %v833
        %v855 = vmul.f32 %v807, %v834
        %v856 = vmul.f32 %v808, %v834
        %v857 = vmul.f32 %v809, %v834
        %v858 = vmul.f32 %v810, %v834
        %v859 = vmul.f32 %v811, %v834
        %v860 = vmul.f32 %v812, %v834
        %v861 = vmul.f32 %v813, %v835
        %v862 = vmul.f32 %v814, %v835
        %v863 = vmul.f32 %v815, %v835
        %v864 = vmul.f32 %v816, %v835
        %v865 = vmul.f32 %v817, %v835
        %v866 = vmul.f32 %v818, %v835
        %v867 = vmul.f32 %v819, %v836
        %v868 = vmul.f32 %v820, %v836
        %v869 = vmul.f32 %v821, %v836
        %v870 = vmul.f32 %v822, %v836
        %v871 = vmul.f32 %v823, %v836
        %v872 = vmul.f32 %v824, %v836
        %v873 = vld [vmem:[%s3] sm:$0x3f]
        %v875 = vlaneseq
        %v876 = vshrl.u32 %v875, 7
        %v877 = vsub.s32 0, %v876
        %v878 = vrot.slane %v873, %v877
        %v879 = vlaneseq
        %v880 = vshrl.u32 %v879, 7
        %v881 = vsub.s32 1, %v880
        %v882 = vrot.slane %v873, %v881
        %v883 = vlaneseq
        %v884 = vshrl.u32 %v883, 7
        %v885 = vsub.s32 2, %v884
        %v886 = vrot.slane %v873, %v885
        %v887 = vlaneseq
        %v888 = vshrl.u32 %v887, 7
        %v889 = vsub.s32 3, %v888
        %v890 = vrot.slane %v873, %v889
        %v891 = vlaneseq
        %v892 = vshrl.u32 %v891, 7
        %v893 = vsub.s32 4, %v892
        %v894 = vrot.slane %v873, %v893
        %v895 = vlaneseq
        %v896 = vshrl.u32 %v895, 7
        %v897 = vsub.s32 5, %v896
        %v898 = vrot.slane %v873, %v897
        %v905 = vmul.f32 %v837, %v878
        %v906 = vmul.f32 %v838, %v882
        %v907 = vmul.f32 %v839, %v886
        %v908 = vmul.f32 %v840, %v890
        %v909 = vmul.f32 %v841, %v894
        %v910 = vmul.f32 %v842, %v898
        %v911 = vmul.f32 %v843, %v878
        %v912 = vmul.f32 %v844, %v882
        %v913 = vmul.f32 %v845, %v886
        %v914 = vmul.f32 %v846, %v890
        %v915 = vmul.f32 %v847, %v894
        %v916 = vmul.f32 %v848, %v898
        %v917 = vmul.f32 %v849, %v878
        %v918 = vmul.f32 %v850, %v882
        %v919 = vmul.f32 %v851, %v886
        %v920 = vmul.f32 %v852, %v890
        %v921 = vmul.f32 %v853, %v894
        %v922 = vmul.f32 %v854, %v898
        %v923 = vmul.f32 %v855, %v878
        %v924 = vmul.f32 %v856, %v882
        %v925 = vmul.f32 %v857, %v886
        %v926 = vmul.f32 %v858, %v890
        %v927 = vmul.f32 %v859, %v894
        %v928 = vmul.f32 %v860, %v898
        %v929 = vmul.f32 %v861, %v878
        %v930 = vmul.f32 %v862, %v882
        %v931 = vmul.f32 %v863, %v886
        %v932 = vmul.f32 %v864, %v890
        %v933 = vmul.f32 %v865, %v894
        %v934 = vmul.f32 %v866, %v898
        %v935 = vmul.f32 %v867, %v878
        %v936 = vmul.f32 %v868, %v882
        %v937 = vmul.f32 %v869, %v886
        %v938 = vmul.f32 %v870, %v890
        %v939 = vmul.f32 %v871, %v894
        %v940 = vmul.f32 %v872, %v898
        %v941 = vld [vmem:[#allocation2] sm:$0xff]
        %v942 = vld [vmem:[#allocation2 + $0x8] sm:$0xff]
        %v943 = vld [vmem:[#allocation2 + $0x10] sm:$0xff]
        %v944 = vld [vmem:[#allocation2 + $0x18] sm:$0xff]
        %v945 = vld [vmem:[#allocation2 + $0x20] sm:$0xff]
        %v946 = vld [vmem:[#allocation2 + $0x28] sm:$0xff]
        %v947 = vld [vmem:[#allocation2 + $0x30] sm:$0xff]
        %v948 = vld [vmem:[#allocation2 + $0x38] sm:$0xff]
        %v949 = vld [vmem:[#allocation2 + $0x40] sm:$0xff]
        %v950 = vld [vmem:[#allocation2 + $0x48] sm:$0xff]
        %v951 = vld [vmem:[#allocation2 + $0x50] sm:$0xff]
        %v952 = vld [vmem:[#allocation2 + $0x58] sm:$0xff]
        %v953 = vld [vmem:[#allocation2 + $0x60] sm:$0xff]
        %v954 = vld [vmem:[#allocation2 + $0x68] sm:$0xff]
        %v955 = vld [vmem:[#allocation2 + $0x70] sm:$0xff]
        %v956 = vld [vmem:[#allocation2 + $0x78] sm:$0xff]
        %v957 = vld [vmem:[#allocation2 + $0x80] sm:$0xff]
        %v958 = vld [vmem:[#allocation2 + $0x88] sm:$0xff]
        %v959 = vld [vmem:[#allocation2 + $0x90] sm:$0xff]
        %v960 = vld [vmem:[#allocation2 + $0x98] sm:$0xff]
        %v961 = vld [vmem:[#allocation2 + $0xa0] sm:$0xff]
        %v962 = vld [vmem:[#allocation2 + $0xa8] sm:$0xff]
        %v963 = vld [vmem:[#allocation2 + $0xb0] sm:$0xff]
        %v964 = vld [vmem:[#allocation2 + $0xb8] sm:$0xff]
        %v965 = vld [vmem:[#allocation2 + $0xc0] sm:$0xff]
        %v966 = vld [vmem:[#allocation2 + $0xc8] sm:$0xff]
        %v967 = vld [vmem:[#allocation2 + $0xd0] sm:$0xff]
        %v968 = vld [vmem:[#allocation2 + $0xd8] sm:$0xff]
        %v969 = vld [vmem:[#allocation2 + $0xe0] sm:$0xff]
        %v970 = vld [vmem:[#allocation2 + $0xe8] sm:$0xff]
        %v971 = vld [vmem:[#allocation2 + $0xf0] sm:$0xff]
        %v972 = vld [vmem:[#allocation2 + $0xf8] sm:$0xff]
        %v973 = vld [vmem:[#allocation2 + $0x100] sm:$0xff]
        %v974 = vld [vmem:[#allocation2 + $0x108] sm:$0xff]
        %v975 = vld [vmem:[#allocation2 + $0x110] sm:$0xff]
        %v976 = vld [vmem:[#allocation2 + $0x118] sm:$0xff]
        %v977 = vadd.f32 %v905, %v941
        %v978 = vadd.f32 %v906, %v942
        %v979 = vadd.f32 %v907, %v943
        %v980 = vadd.f32 %v908, %v944
        %v981 = vadd.f32 %v909, %v945
        %v982 = vadd.f32 %v910, %v946
        %v983 = vadd.f32 %v911, %v947
        %v984 = vadd.f32 %v912, %v948
        %v985 = vadd.f32 %v913, %v949
        %v986 = vadd.f32 %v914, %v950
        %v987 = vadd.f32 %v915, %v951
        %v988 = vadd.f32 %v916, %v952
        %v989 = vadd.f32 %v917, %v953
        %v990 = vadd.f32 %v918, %v954
        %v991 = vadd.f32 %v919, %v955
        %v992 = vadd.f32 %v920, %v956
        %v993 = vadd.f32 %v921, %v957
        %v994 = vadd.f32 %v922, %v958
        %v995 = vadd.f32 %v923, %v959
        %v996 = vadd.f32 %v924, %v960
        %v997 = vadd.f32 %v925, %v961
        %v998 = vadd.f32 %v926, %v962
        %v999 = vadd.f32 %v927, %v963
        %v1000 = vadd.f32 %v928, %v964
        %v1001 = vadd.f32 %v929, %v965
        %v1002 = vadd.f32 %v930, %v966
        %v1003 = vadd.f32 %v931, %v967
        %v1004 = vadd.f32 %v932, %v968
        %v1005 = vadd.f32 %v933, %v969
        %v1006 = vadd.f32 %v934, %v970
        %v1007 = vadd.f32 %v935, %v971
        %v1008 = vadd.f32 %v936, %v972
        %v1009 = vadd.f32 %v937, %v973
        %v1010 = vadd.f32 %v938, %v974
        %v1011 = vadd.f32 %v939, %v975
        %v1012 = vadd.f32 %v940, %v976
        %1013 = vst [vmem:[%s266] sm:$0xff] %v977
        %1014 = vst [vmem:[%s266 + $0x8] sm:$0xff] %v978
        %1015 = vst [vmem:[%s266 + $0x10] sm:$0xff] %v979
        %1016 = vst [vmem:[%s266 + $0x18] sm:$0xff] %v980
        %1017 = vst [vmem:[%s266 + $0x20] sm:$0xff] %v981
        %1018 = vst [vmem:[%s266 + $0x28] sm:$0xff] %v982
        %1019 = vst [vmem:[%s266 + $0x30] sm:$0xff] %v983
        %1020 = vst [vmem:[%s266 + $0x38] sm:$0xff] %v984
        %1021 = vst [vmem:[%s266 + $0x40] sm:$0xff] %v985
        %1022 = vst [vmem:[%s266 + $0x48] sm:$0xff] %v986
        %1023 = vst [vmem:[%s266 + $0x50] sm:$0xff] %v987
        %1024 = vst [vmem:[%s266 + $0x58] sm:$0xff] %v988
        %1025 = vst [vmem:[%s266 + $0x60] sm:$0xff] %v989
        %1026 = vst [vmem:[%s266 + $0x68] sm:$0xff] %v990
        %1027 = vst [vmem:[%s266 + $0x70] sm:$0xff] %v991
        %1028 = vst [vmem:[%s266 + $0x78] sm:$0xff] %v992
        %1029 = vst [vmem:[%s266 + $0x80] sm:$0xff] %v993
        %1030 = vst [vmem:[%s266 + $0x88] sm:$0xff] %v994
        %1031 = vst [vmem:[%s266 + $0x90] sm:$0xff] %v995
        %1032 = vst [vmem:[%s266 + $0x98] sm:$0xff] %v996
        %1033 = vst [vmem:[%s266 + $0xa0] sm:$0xff] %v997
        %1034 = vst [vmem:[%s266 + $0xa8] sm:$0xff] %v998
        %1035 = vst [vmem:[%s266 + $0xb0] sm:$0xff] %v999
        %1036 = vst [vmem:[%s266 + $0xb8] sm:$0xff] %v1000
        %1037 = vst [vmem:[%s266 + $0xc0] sm:$0xff] %v1001
        %1038 = vst [vmem:[%s266 + $0xc8] sm:$0xff] %v1002
        %1039 = vst [vmem:[%s266 + $0xd0] sm:$0xff] %v1003
        %1040 = vst [vmem:[%s266 + $0xd8] sm:$0xff] %v1004
        %1041 = vst [vmem:[%s266 + $0xe0] sm:$0xff] %v1005
        %1042 = vst [vmem:[%s266 + $0xe8] sm:$0xff] %v1006
        %1043 = vst [vmem:[%s266 + $0xf0] sm:$0xff] %v1007
        %1044 = vst [vmem:[%s266 + $0xf8] sm:$0xff] %v1008
        %1045 = vst [vmem:[%s266 + $0x100] sm:$0xff] %v1009
        %1046 = vst [vmem:[%s266 + $0x108] sm:$0xff] %v1010
        %1047 = vst [vmem:[%s266 + $0x110] sm:$0xff] %v1011
        %1048 = vst [vmem:[%s266 + $0x118] sm:$0xff] %v1012
        %s1049 = sand.u32 %s159, 1
        %s1050 = scalar_lea.sflag [#allocation4], %s1049
        %s1051 = sand.u32 %s159, 1
        %s1052 = smul.addr %s1051, 288
        %s1053 = scalar_lea.vmem [#allocation5], %s1052
        // Predicated region
        $region45: #{tpu_custom_call.1} parent=39 // pred_check
          %p1054 = pneg %p169
        $region46: #{tpu_custom_call.1} parent=39 // pred_check_branch
          %1056 = sbr.rel (%p1054) target = $region48
        $region47: #{tpu_custom_call.1} parent=39 // pred_region
          %s1057 = smul.u32 6, %s24
          %s1059 = ssub.s32 4608, 4608
          %1060 = vsyncadd %s1050, %s1059
          %s1061 = smul.addr %s1057, 6
          %s1062 = smul.addr %s25, 36
          %s1063 = sadd.s32 %s1061, %s1062
          %s1064 = smul.addr %s1063, 128
          %s1065 = scalar_lea.hbm %s5, %s1064
          %s1066 = sshll.u32 %s1053, 4
          %s1067 = int_to_ptr.vmem [resolvable:$true] %s1066
          %1072 = dma.vmem_to_hbm [thread:$0]  %s1067, 4608, %s1065, %s1050, 768, 768, 48
        $region48: #{tpu_custom_call.1} parent=39 // pred_fallthru
          _
      $region40: #{tpu_custom_call.1} parent=5 // pred_fallthru
        _
      %p1073 = scmp.le.s32.totalorder 2, %s15
      // Predicated region
      $region49: #{tpu_custom_call.1} parent=5 // pred_check
        %p1074 = pneg %p1073
      $region50: #{tpu_custom_call.1} parent=5 // pred_check_branch
        %1076 = sbr.rel (%p1074) target = $region52
      $region51: #{tpu_custom_call.1} parent=5 // pred_region
        %s1077 = ssub.s32 %s15, 2
        // Predicated region
        $region53: #{tpu_custom_call.1} parent=51 // pred_check
          %p1078 = pneg %p175
        $region54: #{tpu_custom_call.1} parent=51 // pred_check_branch
          %1080 = sbr.rel (%p1078) target = $region56
        $region55: #{tpu_custom_call.1} parent=51 // pred_region
          %s1081 = sand.u32 %s160, 1
          %s1082 = scalar_lea.sflag [#allocation4], %s1081
          %s1083 = sand.u32 %s160, 1
          %s1084 = smul.addr %s1083, 288
          %s1085 = scalar_lea.vmem [#allocation5], %s1084
          %1086 = dma.done %s1082, 4608
        $region56: #{tpu_custom_call.1} parent=51 // pred_fallthru
          _
      $region52: #{tpu_custom_call.1} parent=5 // pred_fallthru
        _
    $region6: #{tpu_custom_call.1} parent=1 // loop_footer
      %s19 = sadd.s32 1, %s15
    $region7: #{tpu_custom_call.1} parent=1 // loop_footer_branch
      %14 = sbr.rel target = $region3
    $region8: #{tpu_custom_call.1} parent=1 // loop_exit
      _
    %1087 = vsyncpa [#allocation3], 1
    %s1088 = scalar_lea.sflag [#allocation3], 1
    %1089 = vsyncpa %s1088, 1
    %1090 = vsyncpa [#allocation4], 1
    %s1091 = scalar_lea.sflag [#allocation4], 1
    %1092 = vsyncpa %s1091, 1

</llo_original>
